<compile_context>
chip_gen: v7x
topology: tpu7x:2x2x1
jax: 0.10.0
libtpu: 0.0.40
codegen_flags: <defaults>
</compile_context>

<pallas_src>
import math

import jax
import jax.numpy as jnp
import numpy as np
from jax.experimental import pallas as pl
from jax.experimental.pallas import tpu as pltpu

_LANE = 128  # lane width: hidden and output dims are zero-padded to this.


def _fisher_mlp_kernel(x_ref, w1_ref, b1_ref, w2_ref, b2_ref, out_ref, h1_ref):
    """One batch tile of the fused 2-layer MLP.

    x_ref  : (TILE, S)      f32   natural-width input rows
    w1_ref : (S, 128)       f32   layer-1 weights, transposed + lane-padded
    b1_ref : (1, 128)       f32   layer-1 bias, lane-padded with zeros
    w2_ref : (128, 128)     f32   layer-2 weights, transposed + zero-padded
    b2_ref : (1, 128)       f32   layer-2 bias, lane-padded with zeros
    out_ref: (TILE, 128)    f32   lane-dense padded output
    h1_ref : (TILE, 128)    f32   lane-dense padded hidden activation
    """
    tile = x_ref.shape[0]
    s_dim = x_ref.shape[1]

    x = x_ref[...]           # (TILE, S)
    w1 = w1_ref[...]         # (S, 128)

    # Layer 1 on the VPU: stateDim is tiny, so an unrolled sequence of rank-1
    # FMAs avoids padding x to 128 lanes (and avoids a throwaway MXU pass).
    h1 = jnp.broadcast_to(b1_ref[...], (tile, _LANE))           # bias, hoisted once
    for k in range(s_dim):                                      # static unroll
        h1 = h1 + x[:, k:k + 1] * w1[k:k + 1, :]
    h1 = jnp.maximum(h1, 0.0)                                   # ReLU
    h1_ref[...] = h1

    # Layer 2 on the MXU: K = 128 (lane-padded hidden), f32 accumulation.
    out_ref[...] = (
        jnp.dot(h1, w2_ref[...], preferred_element_type=jnp.float32)
        + b2_ref[...]
    )


def _round_up(a, m):
    return ((a + m - 1) // m) * m


def fisher_mlp_forward(x, w1, b1, w2, b2, *, block_rows=1024):
    """Fused FisherNet MLP forward.

    x : (B, stateDim) f32
    w1: (hidden, stateDim)   (torch nn.Linear layout)
    b1: (hidden,)
    w2: (outDim, hidden)
    b2: (outDim,)
    Returns (out (B, outDim), h1 (B, hidden)).
    """
    x = jnp.asarray(x, jnp.float32)
    B, S = x.shape
    H = w1.shape[0]
    O = w2.shape[0]

    # Pre-transpose + zero-pad parameters (zero padding is exact for Linear+ReLU).
    w1p = jnp.zeros((S, _LANE), jnp.float32).at[:, :H].set(jnp.asarray(w1, jnp.float32).T)
    b1p = jnp.zeros((1, _LANE), jnp.float32).at[0, :H].set(jnp.asarray(b1, jnp.float32))
    w2p = jnp.zeros((_LANE, _LANE), jnp.float32).at[:H, :O].set(jnp.asarray(w2, jnp.float32).T)
    b2p = jnp.zeros((1, _LANE), jnp.float32).at[0, :O].set(jnp.asarray(b2, jnp.float32))

    # Large batch tiles (sublane-aligned); pad the batch with zero rows.
    tile = min(block_rows, _round_up(B, 8))
    Bp = _round_up(B, tile)
    xp = x
    if Bp != B:
        xp = jnp.zeros((Bp, S), jnp.float32).at[:B].set(x)

    grid = (Bp // tile,)

    grid_spec = pltpu.PrefetchScalarGridSpec(
        num_scalar_prefetch=0,
        grid=grid,
        in_specs=[
            pl.BlockSpec((tile, S), lambda i: (i, 0)),        # x: tiled over batch
            pl.BlockSpec((S, _LANE), lambda i: (0, 0)),       # W1: resident in VMEM
            pl.BlockSpec((1, _LANE), lambda i: (0, 0)),       # b1: resident
            pl.BlockSpec((_LANE, _LANE), lambda i: (0, 0)),   # W2: resident
            pl.BlockSpec((1, _LANE), lambda i: (0, 0)),       # b2: resident
        ],
        out_specs=[
            pl.BlockSpec((tile, _LANE), lambda i: (i, 0)),    # out (lane-dense)
            pl.BlockSpec((tile, _LANE), lambda i: (i, 0)),    # h1  (lane-dense)
        ],
    )

    out_pad, h1_pad = pl.pallas_call(
        _fisher_mlp_kernel,
        grid_spec=grid_spec,
        out_shape=(
            jax.ShapeDtypeStruct((Bp, _LANE), jnp.float32),
            jax.ShapeDtypeStruct((Bp, _LANE), jnp.float32),
        ),
        compiler_params=pltpu.CompilerParams(
            dimension_semantics=("parallel",),
        ),
    )(xp, w1p, b1p, w2p, b2p)

    # Slice back to logical shapes outside the kernel (keeps in-kernel stores
    # unmasked / lane-dense).
    return out_pad[:B, :O], h1_pad[:B, :H]


def _kaiming_uniform(key, shape, fan_in):
    # torch.nn.init.kaiming_uniform_(mode='fan_in', nonlinearity='relu')
    gain = math.sqrt(2.0)
    bound = gain * math.sqrt(3.0 / fan_in)
    return jax.random.uniform(key, shape, jnp.float32, -bound, bound)


class FisherNetPallas:
    """FisherNet with the MLP hot path on a Pallas TPU kernel.

    The NumPy side-state (utility EMAs) mirrors the PyTorch module's forward()
    bookkeeping and runs on host, exactly as in the reference.
    """

    def __init__(self, stateDim, outDim, key):
        hiddenLayerDim = 5
        k1, k2 = jax.random.split(key)
        self.w1 = _kaiming_uniform(k1, (hiddenLayerDim, stateDim), stateDim)
        self.b1 = jnp.zeros((hiddenLayerDim,), jnp.float32)
        self.w2 = _kaiming_uniform(k2, (outDim, hiddenLayerDim), hiddenLayerDim)
        self.b2 = jnp.zeros((outDim,), jnp.float32)
        self.outDim = outDim

        self.hiddenUnits = np.zeros(hiddenLayerDim)
        self.hiddenUnitsAvg = np.zeros(hiddenLayerDim)
        self.hiddenUnitsAvgBias = np.zeros(hiddenLayerDim)
        self.hiddenUnitsAge = np.zeros(hiddenLayerDim)
        self.hiddenUtilityBias = np.zeros(hiddenLayerDim)
        self.hiddenUtility = np.zeros(hiddenLayerDim)
        self.decayRate = 0.99

    def forward(self, x):
        out, h1 = fisher_mlp_forward(x, self.w1, self.b1, self.w2, self.b2)
        h1_np = np.asarray(jax.block_until_ready(h1))

        # Host-side hidden-unit utility bookkeeping (same math as the module).
        # As in the reference, it assumes a single sample (h1 has 5 elements).
        self.hiddenUnitsAge += 1
        self.hiddenUnits = np.reshape(h1_np, self.hiddenUnitsAvgBias.shape[0])
        self.hiddenUnitsAvg = self.hiddenUnitsAvgBias / (
            1 - np.power(self.decayRate, self.hiddenUnitsAge))
        self.hiddenUnitsAvgBias = (self.decayRate * self.hiddenUnitsAvgBias
                                   + (1 - self.decayRate) * self.hiddenUnits)
        outgoingWeights = np.sum(np.abs(np.asarray(self.w2)), axis=0).flatten()
        contribUtility = np.multiply(
            np.abs(self.hiddenUnits - self.hiddenUnitsAvg), outgoingWeights)
        inputWeights = np.sum(np.abs(np.asarray(self.w1)), axis=1).flatten()
        self.hiddenUtility = self.hiddenUtilityBias / (
            1 - np.power(self.decayRate, self.hiddenUnitsAge))
        self.hiddenUtilityBias = (self.decayRate * self.hiddenUtilityBias
                                  + (1 - self.decayRate) * contribUtility / inputWeights)
        return out

    # TODO(synk): computeFisher / FisherReplacement / genAndTest operate on
    # gradients and host-side weight surgery; they have no kernel hot path and
    # are left to host NumPy (not implemented here).


if __name__ == "__main__":
    key = jax.random.PRNGKey(0)
    stateDim, outDim = 4, 3
    k_params, k_x_batch, k_x_one = jax.random.split(key, 3)

    net = FisherNetPallas(stateDim, outDim, k_params)

    # 1) Batched correctness check of the fused Pallas MLP kernel.
    x_batch = jax.random.normal(k_x_batch, (16, stateDim), jnp.float32)
    out, h1 = fisher_mlp_forward(x_batch, net.w1, net.b1, net.w2, net.b2)
    out = jax.block_until_ready(out)
    h1 = jax.block_until_ready(h1)

    h1_ref = jnp.maximum(x_batch @ net.w1.T + net.b1, 0.0)
    out_ref = h1_ref @ net.w2.T + net.b2
    np.testing.assert_allclose(np.asarray(h1), np.asarray(h1_ref), rtol=1e-5, atol=1e-5)
    np.testing.assert_allclose(np.asarray(out), np.asarray(out_ref), rtol=1e-5, atol=1e-5)

    # 2) Full FisherNet.forward semantics (batch=1, matching the module's
    #    reshape-to-(5,) bookkeeping) including the NumPy side-state update.
    x_one = jax.random.normal(k_x_one, (1, stateDim), jnp.float32)
    y = net.forward(x_one)
    y = jax.block_until_ready(y)
    assert y.shape == (1, outDim)
    assert np.all(net.hiddenUnitsAge == 1.0)

    print("KERNEL_OK")
</pallas_src>

<mosaic_0001>
module attributes {stable_mosaic.version = 11 : i64} {
  func.func @_fisher_mlp_kernel(%arg0: i32, %arg1: memref<16x4xf32, #tpu.memory_space<vmem>>, %arg2: memref<4x128xf32, #tpu.memory_space<vmem>>, %arg3: memref<1x128xf32, #tpu.memory_space<vmem>>, %arg4: memref<128x128xf32, #tpu.memory_space<vmem>>, %arg5: memref<1x128xf32, #tpu.memory_space<vmem>>, %arg6: memref<16x128xf32, #tpu.memory_space<vmem>>, %arg7: memref<16x128xf32, #tpu.memory_space<vmem>>) attributes {dimension_semantics = [#tpu.dimension_semantics<parallel>], iteration_bounds = array<i64: 1>, scalar_prefetch = 0 : i64, scratch_operands = 0 : i64, tpu.core_type = #tpu.core_type<tc>, window_params = [{transform_indices = @transform_0, window_bounds = array<i64: 16, 4>}, {pipeline_mode = #tpu.pipeline_mode<synchronous>, transform_indices = @transform_1, window_bounds = array<i64: 4, 128>}, {pipeline_mode = #tpu.pipeline_mode<synchronous>, transform_indices = @transform_2, window_bounds = array<i64: 1, 128>}, {pipeline_mode = #tpu.pipeline_mode<synchronous>, transform_indices = @transform_3, window_bounds = array<i64: 128, 128>}, {pipeline_mode = #tpu.pipeline_mode<synchronous>, transform_indices = @transform_4, window_bounds = array<i64: 1, 128>}, {transform_indices = @transform_5, window_bounds = array<i64: 16, 128>}, {transform_indices = @transform_6, window_bounds = array<i64: 16, 128>}]} {
    %c0 = arith.constant 0 : index
    %c0_0 = arith.constant 0 : index
    %0 = vector.load %arg1[%c0, %c0_0] : memref<16x4xf32, #tpu.memory_space<vmem>>, vector<16x4xf32>
    %c0_1 = arith.constant 0 : index
    %c0_2 = arith.constant 0 : index
    %1 = vector.load %arg2[%c0_1, %c0_2] : memref<4x128xf32, #tpu.memory_space<vmem>>, vector<4x128xf32>
    %c0_3 = arith.constant 0 : index
    %c0_4 = arith.constant 0 : index
    %2 = vector.load %arg3[%c0_3, %c0_4] : memref<1x128xf32, #tpu.memory_space<vmem>>, vector<1x128xf32>
    %3 = vector.shape_cast %2 : vector<1x128xf32> to vector<1x128xf32>
    %4 = vector.broadcast %3 : vector<1x128xf32> to vector<16x128xf32>
    %5 = vector.extract_strided_slice %0 {offsets = [0, 0], sizes = [16, 1], strides = [1, 1]} : vector<16x4xf32> to vector<16x1xf32>
    %6 = vector.extract_strided_slice %1 {offsets = [0, 0], sizes = [1, 128], strides = [1, 1]} : vector<4x128xf32> to vector<1x128xf32>
    %7 = vector.broadcast %5 : vector<16x1xf32> to vector<16x128xf32>
    %8 = vector.broadcast %6 : vector<1x128xf32> to vector<16x128xf32>
    %9 = arith.mulf %7, %8 : vector<16x128xf32>
    %10 = arith.addf %4, %9 : vector<16x128xf32>
    %11 = vector.extract_strided_slice %0 {offsets = [0, 1], sizes = [16, 1], strides = [1, 1]} : vector<16x4xf32> to vector<16x1xf32>
    %12 = vector.extract_strided_slice %1 {offsets = [1, 0], sizes = [1, 128], strides = [1, 1]} : vector<4x128xf32> to vector<1x128xf32>
    %13 = vector.broadcast %11 : vector<16x1xf32> to vector<16x128xf32>
    %14 = vector.broadcast %12 : vector<1x128xf32> to vector<16x128xf32>
    %15 = arith.mulf %13, %14 : vector<16x128xf32>
    %16 = arith.addf %10, %15 : vector<16x128xf32>
    %17 = vector.extract_strided_slice %0 {offsets = [0, 2], sizes = [16, 1], strides = [1, 1]} : vector<16x4xf32> to vector<16x1xf32>
    %18 = vector.extract_strided_slice %1 {offsets = [2, 0], sizes = [1, 128], strides = [1, 1]} : vector<4x128xf32> to vector<1x128xf32>
    %19 = vector.broadcast %17 : vector<16x1xf32> to vector<16x128xf32>
    %20 = vector.broadcast %18 : vector<1x128xf32> to vector<16x128xf32>
    %21 = arith.mulf %19, %20 : vector<16x128xf32>
    %22 = arith.addf %16, %21 : vector<16x128xf32>
    %23 = vector.extract_strided_slice %0 {offsets = [0, 3], sizes = [16, 1], strides = [1, 1]} : vector<16x4xf32> to vector<16x1xf32>
    %24 = vector.extract_strided_slice %1 {offsets = [3, 0], sizes = [1, 128], strides = [1, 1]} : vector<4x128xf32> to vector<1x128xf32>
    %25 = vector.broadcast %23 : vector<16x1xf32> to vector<16x128xf32>
    %26 = vector.broadcast %24 : vector<1x128xf32> to vector<16x128xf32>
    %27 = arith.mulf %25, %26 : vector<16x128xf32>
    %28 = arith.addf %22, %27 : vector<16x128xf32>
    %cst = arith.constant 0.000000e+00 : f32
    %29 = vector.broadcast %cst : f32 to vector<16x128xf32>
    %30 = arith.maximumf %28, %29 : vector<16x128xf32>
    %c0_5 = arith.constant 0 : index
    %c0_6 = arith.constant 0 : index
    %31 = vector.load %arg7[%c0_5, %c0_6] : memref<16x128xf32, #tpu.memory_space<vmem>>, vector<16x128xf32>
    tpu.vector_store %arg7[%c0_5, %c0_6], %30 {strides = array<i32>} : memref<16x128xf32, #tpu.memory_space<vmem>>, vector<16x128xf32>,
    %c0_7 = arith.constant 0 : index
    %c0_8 = arith.constant 0 : index
    %32 = vector.load %arg4[%c0_7, %c0_8] : memref<128x128xf32, #tpu.memory_space<vmem>>, vector<128x128xf32>
    %cst_9 = arith.constant dense<0.000000e+00> : vector<16x128xf32>
    %33 = tpu.matmul %30, %32, %cst_9 {dimension_numbers = #tpu.dot_dimension_numbers<[1], [0], [0], [1], [0, 0, 1, 1], [], []>} : vector<16x128xf32>, vector<128x128xf32>, vector<16x128xf32> -> vector<16x128xf32>
    %c0_10 = arith.constant 0 : index
    %c0_11 = arith.constant 0 : index
    %34 = vector.load %arg5[%c0_10, %c0_11] : memref<1x128xf32, #tpu.memory_space<vmem>>, vector<1x128xf32>
    %35 = vector.broadcast %34 : vector<1x128xf32> to vector<16x128xf32>
    %36 = arith.addf %33, %35 : vector<16x128xf32>
    %c0_12 = arith.constant 0 : index
    %c0_13 = arith.constant 0 : index
    %37 = vector.load %arg6[%c0_12, %c0_13] : memref<16x128xf32, #tpu.memory_space<vmem>>, vector<16x128xf32>
    tpu.vector_store %arg6[%c0_12, %c0_13], %36 {strides = array<i32>} : memref<16x128xf32, #tpu.memory_space<vmem>>, vector<16x128xf32>,
    return
  }
  func.func @transform_0(%arg0: i32) -> (i32, i32) {
    %c0_i32 = arith.constant 0 : i32
    %c0_i32_0 = arith.constant 0 : i32
    return %arg0, %c0_i32 : i32, i32
  }
  func.func @transform_1(%arg0: i32) -> (i32, i32) {
    %c0_i32 = arith.constant 0 : i32
    %c0_i32_0 = arith.constant 0 : i32
    %c0_i32_1 = arith.constant 0 : i32
    return %c0_i32, %c0_i32_0 : i32, i32
  }
  func.func @transform_2(%arg0: i32) -> (i32, i32) {
    %c0_i32 = arith.constant 0 : i32
    %c0_i32_0 = arith.constant 0 : i32
    %c0_i32_1 = arith.constant 0 : i32
    return %c0_i32, %c0_i32_0 : i32, i32
  }
  func.func @transform_3(%arg0: i32) -> (i32, i32) {
    %c0_i32 = arith.constant 0 : i32
    %c0_i32_0 = arith.constant 0 : i32
    %c0_i32_1 = arith.constant 0 : i32
    return %c0_i32, %c0_i32_0 : i32, i32
  }
  func.func @transform_4(%arg0: i32) -> (i32, i32) {
    %c0_i32 = arith.constant 0 : i32
    %c0_i32_0 = arith.constant 0 : i32
    %c0_i32_1 = arith.constant 0 : i32
    return %c0_i32, %c0_i32_0 : i32, i32
  }
  func.func @transform_5(%arg0: i32) -> (i32, i32) {
    %c0_i32 = arith.constant 0 : i32
    %c0_i32_0 = arith.constant 0 : i32
    return %arg0, %c0_i32 : i32, i32
  }
  func.func @transform_6(%arg0: i32) -> (i32, i32) {
    %c0_i32 = arith.constant 0 : i32
    %c0_i32_0 = arith.constant 0 : i32
    return %arg0, %c0_i32 : i32, i32
  }
}

</mosaic_0001>

<llo_original>
// kernel: tpu_custom_call.1
$region0: #{tpu_custom_call.1}
  #allocation0 [shape = 'u32[]', space=smem, size = 0x4, offset = 0x4, fixed_abs, tag = 'smem constant byte address 0x4 - core index']
  #allocation1 [shape = 'u32[144,128]{1,0:T(1,128)}', space=vmem, size = 0x12000, scoped, tag = 'internal scratch']
  %s0 = inlined_call_operand.vmem [shape: f32[16,4], index: 0, kind: input, shape index: {}]
  %s1 = inlined_call_operand.vmem [shape: f32[4,128], index: 1, kind: input, shape index: {}]
  %s2 = inlined_call_operand.vmem [shape: f32[1,128], index: 2, kind: input, shape index: {}]
  %s3 = inlined_call_operand.hbm [shape: f32[128,128], index: 3, kind: input, shape index: {}]
  %s4 = inlined_call_operand.vmem [shape: f32[1,128], index: 4, kind: input, shape index: {}]
  %s5 = inlined_call_operand.hbm [shape: f32[16,128], index: 5, kind: output, shape index: {0}]
  %s6 = inlined_call_operand.hbm [shape: f32[16,128], index: 6, kind: output, shape index: {1}]
  %7 = xla_tuple %s5, %s6
  %s8 = sld [smem:[#allocation0]]
  $region42: #{tpu_custom_call.1} parent=0
    _
  %s10 = ssub.s32 1, %s8
  %s11 = scalar_select 0, %s10, %s8
  $region1: #{tpu_custom_call.1} parent=0
    #allocation2 [shape = 'u8[65536]{0}', space=vmem, size = 0x10000, scoped, tag = 'input window, operand 3, single buffered']
    #allocation3 [shape = 's32[1]{0}', space=sflag, size = 0x4, scoped, tag = 'scoped memory for tpu_custom_call.1']
    #allocation4 [shape = 's32[1]{0}', space=sflag, size = 0x4, scoped, tag = 'scoped memory for tpu_custom_call.1']
    #allocation5 [shape = 'u8[8192]{0}', space=vmem, size = 0x2000, scoped, tag = 'output window, operand 0, single buffered']
    #allocation6 [shape = 'u8[8192]{0}', space=vmem, size = 0x2000, scoped, tag = 'output window, operand 1, single buffered']
    #allocation7 [shape = 's32[1]{0}', space=sflag, size = 0x4, scoped, tag = 'scoped memory for tpu_custom_call.1']
    %12 = vsyncpa [#allocation3], 0
    %13 = vsyncpa [#allocation4], 0
    %14 = vsyncpa [#allocation7], 0
    // Predicated region
    $region2: #{tpu_custom_call.1} parent=1 // pred_check
      _
    $region3: #{tpu_custom_call.1} parent=1 // pred_check_branch
      %16 = sbr.rel (0) target = $region5
    $region4: #{tpu_custom_call.1} parent=1 // pred_region
      _
    $region5: #{tpu_custom_call.1} parent=1 // pred_fallthru
      _
    // Predicated region
    $region6: #{tpu_custom_call.1} parent=1 // pred_check
      _
    $region7: #{tpu_custom_call.1} parent=1 // pred_check_branch
      %18 = sbr.rel (0) target = $region9
    $region8: #{tpu_custom_call.1} parent=1 // pred_region
      _
    $region9: #{tpu_custom_call.1} parent=1 // pred_fallthru
      _
    // Predicated region
    $region10: #{tpu_custom_call.1} parent=1 // pred_check
      _
    $region11: #{tpu_custom_call.1} parent=1 // pred_check_branch
      %20 = sbr.rel (0) target = $region13
    $region12: #{tpu_custom_call.1} parent=1 // pred_region
      _
    $region13: #{tpu_custom_call.1} parent=1 // pred_fallthru
      _
    // Predicated region
    $region14: #{tpu_custom_call.1} parent=1 // pred_check
      _
    $region15: #{tpu_custom_call.1} parent=1 // pred_check_branch
      %22 = sbr.rel (0) target = $region17
    $region16: #{tpu_custom_call.1} parent=1 // pred_region
      %s24 = ssub.s32 2048, 2048
      %25 = vsyncadd [#allocation3], %s24
      %s26 = sshll.u32 [#allocation2], 4
      %s27 = int_to_ptr.vmem [resolvable:$true] %s26
      %32 = dma.hbm_to_vmem [thread:$0]  %s3, 2048, %s27, [#allocation3], 128, 128, 8
    $region17: #{tpu_custom_call.1} parent=1 // pred_fallthru
      _
    // Predicated region
    $region18: #{tpu_custom_call.1} parent=1 // pred_check
      _
    $region19: #{tpu_custom_call.1} parent=1 // pred_check_branch
      %34 = sbr.rel (0) target = $region21
    $region20: #{tpu_custom_call.1} parent=1 // pred_region
      _
    $region21: #{tpu_custom_call.1} parent=1 // pred_fallthru
      _
    // Predicated region
    $region22: #{tpu_custom_call.1} parent=1 // pred_check
      _
    $region23: #{tpu_custom_call.1} parent=1 // pred_check_branch
      %36 = sbr.rel (0) target = $region25
    $region24: #{tpu_custom_call.1} parent=1 // pred_region
      %37 = dma.done [#allocation3], 2048
    $region25: #{tpu_custom_call.1} parent=1 // pred_fallthru
      _
    %v38 = vld [vmem:[%s0] sm:$0xff]
    %v39 = vld [vmem:[%s0 + $0x8] sm:$0xff]
    %v40 = vld [vmem:[%s1] sm:$0xf]
    %v41 = vld [vmem:[%s2] sm:$0x1]
    %v43 = vlaneseq
    %v44 = vshrl.u32 %v43, 7
    %v45 = vsub.s32 0, %v44
    %v46 = vrot.slane %v41, %v45
    %49 = vset.pattern.permute.xlu0 0
    %50 = vperm.xlu0 %49, %v38
    %v51 = vpop.permute.xlu0 %50
    %54 = vset.pattern.permute.xlu0 0
    %55 = vperm.xlu0 %54, %v39
    %v56 = vpop.permute.xlu0 %55
    %v58 = vlaneseq
    %v59 = vshrl.u32 %v58, 7
    %v60 = vsub.s32 0, %v59
    %v61 = vrot.slane %v40, %v60
    %v62 = vmul.f32 %v51, %v61
    %v63 = vmul.f32 %v56, %v61
    %v64 = vadd.f32 %v46, %v62
    %v65 = vadd.f32 %v46, %v63
    %66 = vset.pattern.permute.xlu0 1
    %67 = vperm.xlu0 %66, %v38
    %v68 = vpop.permute.xlu0 %67
    %70 = vset.pattern.permute.xlu0 1
    %71 = vperm.xlu0 %70, %v39
    %v72 = vpop.permute.xlu0 %71
    %v74 = vlaneseq
    %v75 = vshrl.u32 %v74, 7
    %v76 = vsub.s32 1, %v75
    %v77 = vrot.slane %v40, %v76
    %v78 = vmul.f32 %v68, %v77
    %v79 = vmul.f32 %v72, %v77
    %v80 = vadd.f32 %v64, %v78
    %v81 = vadd.f32 %v65, %v79
    %82 = vset.pattern.permute.xlu0 2
    %83 = vperm.xlu0 %82, %v38
    %v84 = vpop.permute.xlu0 %83
    %86 = vset.pattern.permute.xlu0 2
    %87 = vperm.xlu0 %86, %v39
    %v88 = vpop.permute.xlu0 %87
    %v90 = vlaneseq
    %v91 = vshrl.u32 %v90, 7
    %v92 = vsub.s32 2, %v91
    %v93 = vrot.slane %v40, %v92
    %v94 = vmul.f32 %v84, %v93
    %v95 = vmul.f32 %v88, %v93
    %v96 = vadd.f32 %v80, %v94
    %v97 = vadd.f32 %v81, %v95
    %98 = vset.pattern.permute.xlu0 3
    %99 = vperm.xlu0 %98, %v38
    %v100 = vpop.permute.xlu0 %99
    %102 = vset.pattern.permute.xlu0 3
    %103 = vperm.xlu0 %102, %v39
    %v104 = vpop.permute.xlu0 %103
    %v106 = vlaneseq
    %v107 = vshrl.u32 %v106, 7
    %v108 = vsub.s32 3, %v107
    %v109 = vrot.slane %v40, %v108
    %v110 = vmul.f32 %v100, %v109
    %v111 = vmul.f32 %v104, %v109
    %v112 = vadd.f32 %v96, %v110
    %v113 = vadd.f32 %v97, %v111
    %v114 = vmax.f32 %v112, 0.0
    %v115 = vmax.f32 %v113, 0.0
    %116 = vst [vmem:[#allocation6] sm:$0xff] %v114
    %117 = vst [vmem:[#allocation6 + $0x8] sm:$0xff] %v115
    %v118 = vld [vmem:[#allocation2] sm:$0xff]
    %v119 = vld [vmem:[#allocation2 + $0x8] sm:$0xff]
    %v120 = vld [vmem:[#allocation2 + $0x10] sm:$0xff]
    %v121 = vld [vmem:[#allocation2 + $0x18] sm:$0xff]
    %v122 = vld [vmem:[#allocation2 + $0x20] sm:$0xff]
    %v123 = vld [vmem:[#allocation2 + $0x28] sm:$0xff]
    %v124 = vld [vmem:[#allocation2 + $0x30] sm:$0xff]
    %v125 = vld [vmem:[#allocation2 + $0x38] sm:$0xff]
    %v126 = vld [vmem:[#allocation2 + $0x40] sm:$0xff]
    %v127 = vld [vmem:[#allocation2 + $0x48] sm:$0xff]
    %v128 = vld [vmem:[#allocation2 + $0x50] sm:$0xff]
    %v129 = vld [vmem:[#allocation2 + $0x58] sm:$0xff]
    %v130 = vld [vmem:[#allocation2 + $0x60] sm:$0xff]
    %v131 = vld [vmem:[#allocation2 + $0x68] sm:$0xff]
    %v132 = vld [vmem:[#allocation2 + $0x70] sm:$0xff]
    %v133 = vld [vmem:[#allocation2 + $0x78] sm:$0xff]
    %v134 = vld [vmem:[%s4] sm:$0x1]
    %v136 = vlaneseq
    %v137 = vshrl.u32 %v136, 7
    %v138 = vsub.s32 0, %v137
    %v139 = vrot.slane %v134, %v138
    %141 = vmatprep.subr.mxu0 0.0
    %142 = vmatpush1.msra.mxu0 %v118
    %143 = vmatprep.subr.mxu0 0.0
    %144 = vmatpush1.msra.mxu0 %v119
    %145 = vmatprep.subr.mxu0 0.0
    %146 = vmatpush1.msra.mxu0 %v120
    %147 = vmatprep.subr.mxu0 0.0
    %148 = vmatpush1.msra.mxu0 %v121
    %149 = vmatprep.subr.mxu0 0.0
    %150 = vmatpush1.msra.mxu0 %v122
    %151 = vmatprep.subr.mxu0 0.0
    %152 = vmatpush1.msra.mxu0 %v123
    %153 = vmatprep.subr.mxu0 0.0
    %154 = vmatpush1.msra.mxu0 %v124
    %155 = vmatprep.subr.mxu0 0.0
    %156 = vmatpush1.msra.mxu0 %v125
    %157 = vmatprep.subr.mxu0 0.0
    %158 = vmatpush1.msra.mxu0 %v126
    %159 = vmatprep.subr.mxu0 0.0
    %160 = vmatpush1.msra.mxu0 %v127
    %161 = vmatprep.subr.mxu0 0.0
    %162 = vmatpush1.msra.mxu0 %v128
    %163 = vmatprep.subr.mxu0 0.0
    %164 = vmatpush1.msra.mxu0 %v129
    %165 = vmatprep.subr.mxu0 0.0
    %166 = vmatpush1.msra.mxu0 %v130
    %167 = vmatprep.subr.mxu0 0.0
    %168 = vmatpush1.msra.mxu0 %v131
    %169 = vmatprep.subr.mxu0 0.0
    %170 = vmatpush1.msra.mxu0 %v132
    %171 = vmatprep.subr.mxu0 0.0
    %172 = vmatpush1.msra.mxu0 %v133
    %173 = vmatprep.subr.mxu0 0.0
    %174 = vmatpush1.msra.mxu0 0.0
    %175 = vmatprep.subr.mxu0 0.0
    %176 = vmatpush1.msra.mxu0 0.0
    %177 = vmatprep.subr.mxu0 0.0
    %178 = vmatpush1.msra.mxu0 0.0
    %179 = vmatprep.subr.mxu0 0.0
    %180 = vmatpush1.msra.mxu0 0.0
    %181 = vmatprep.subr.mxu0 0.0
    %182 = vmatpush1.msra.mxu0 0.0
    %183 = vmatprep.subr.mxu0 0.0
    %184 = vmatpush1.msra.mxu0 0.0
    %185 = vmatprep.subr.mxu0 0.0
    %186 = vmatpush1.msra.mxu0 0.0
    %187 = vmatprep.subr.mxu0 0.0
    %188 = vmatpush1.msra.mxu0 0.0
    %189 = vmatprep.subr.mxu0 0.0
    %190 = vmatpush1.msra.mxu0 0.0
    %191 = vmatprep.subr.mxu0 0.0
    %192 = vmatpush1.msra.mxu0 0.0
    %193 = vmatprep.subr.mxu0 0.0
    %194 = vmatpush1.msra.mxu0 0.0
    %195 = vmatprep.subr.mxu0 0.0
    %196 = vmatpush1.msra.mxu0 0.0
    %197 = vmatprep.subr.mxu0 0.0
    %198 = vmatpush1.msra.mxu0 0.0
    %199 = vmatprep.subr.mxu0 0.0
    %200 = vmatpush1.msra.mxu0 0.0
    %201 = vmatprep.subr.mxu0 0.0
    %202 = vmatpush1.msra.mxu0 0.0
    %203 = vmatprep.subr.mxu0 0.0
    %204 = vmatpush1.msra.mxu0 0.0
    %205 = vmatprep.mubr.f32.mxu0 0.0
    %206 = vmatmul.mubr.f32.gmra.mrb[0].mxu0 %v114
    %v207 = vpop.f32.mrb[0].mxu0
    %v208 = vadd.f32 %v139, %v207
    %v209 = vpop.f32.mrb[0].mxu0
    %210 = vmatprep.mubr.f32.mxu0 0.0
    %211 = vmatmul.mubr.f32.gmra.mrb[0].mxu0 %v115
    %v212 = vpop.f32.mrb[0].mxu0
    %v213 = vadd.f32 %v139, %v212
    %v214 = vpop.f32.mrb[0].mxu0
    %215 = vdwg.mxu0
    %216 = vst [vmem:[#allocation5] sm:$0xff] %v208
    %217 = vst [vmem:[#allocation5 + $0x8] sm:$0xff] %v213
    // Predicated region
    $region26: #{tpu_custom_call.1} parent=1 // pred_check
      _
    $region27: #{tpu_custom_call.1} parent=1 // pred_check_branch
      %219 = sbr.rel (0) target = $region29
    $region28: #{tpu_custom_call.1} parent=1 // pred_region
      %s221 = ssub.s32 256, 256
      %222 = vsyncadd [#allocation4], %s221
      %s223 = sshll.u32 [#allocation5], 4
      %s224 = int_to_ptr.vmem [resolvable:$true] %s223
      %229 = dma.vmem_to_hbm [thread:$0]  %s224, 256, %s5, [#allocation4], 128, 128, 8
    $region29: #{tpu_custom_call.1} parent=1 // pred_fallthru
      _
    // Predicated region
    $region30: #{tpu_custom_call.1} parent=1 // pred_check
      _
    $region31: #{tpu_custom_call.1} parent=1 // pred_check_branch
      %231 = sbr.rel (0) target = $region33
    $region32: #{tpu_custom_call.1} parent=1 // pred_region
      %s233 = ssub.s32 256, 256
      %234 = vsyncadd [#allocation7], %s233
      %s235 = sshll.u32 [#allocation6], 4
      %s236 = int_to_ptr.vmem [resolvable:$true] %s235
      %241 = dma.vmem_to_hbm [thread:$0]  %s236, 256, %s6, [#allocation7], 128, 128, 8
    $region33: #{tpu_custom_call.1} parent=1 // pred_fallthru
      _
    // Predicated region
    $region34: #{tpu_custom_call.1} parent=1 // pred_check
      _
    $region35: #{tpu_custom_call.1} parent=1 // pred_check_branch
      %243 = sbr.rel (0) target = $region37
    $region36: #{tpu_custom_call.1} parent=1 // pred_region
      %244 = dma.done [#allocation4], 256
    $region37: #{tpu_custom_call.1} parent=1 // pred_fallthru
      _
    // Predicated region
    $region38: #{tpu_custom_call.1} parent=1 // pred_check
      _
    $region39: #{tpu_custom_call.1} parent=1 // pred_check_branch
      %246 = sbr.rel (0) target = $region41
    $region40: #{tpu_custom_call.1} parent=1 // pred_region
      %247 = dma.done [#allocation7], 256
    $region41: #{tpu_custom_call.1} parent=1 // pred_fallthru
      _
    %248 = vsyncpa [#allocation3], 1
    %249 = vsyncpa [#allocation4], 1
    %250 = vsyncpa [#allocation7], 1

</llo_original>
